<compile_context>
chip_gen: v6e
topology: v6e:2x2x1
jax: 0.10.0
libtpu: 0.0.40
codegen_flags: <defaults>
</compile_context>

<pallas_src>
import functools

import jax
import jax.numpy as jnp
from jax import lax
from jax.experimental import pallas as pl
from jax.experimental.pallas import tpu as pltpu


def _random_drop_kernel(seed_ref, *rest, feat_total, tile_b, tile_f,
                        p_const, p_per_row):
    # seed_ref : SMEM (1,) int32                         -- mask seed
    # rest     : [p_ref (TILE_B,1) f32 VMEM]? , x_ref, o_ref  (TILE_B, TILE_F)
    if p_per_row:
        p_ref, x_ref, o_ref = rest
    else:
        x_ref, o_ref = rest

    tb = pl.program_id(0)
    tf = pl.program_id(1)
    shp = x_ref.shape

    # Global element index of every lane in this tile (int32, wraps harmlessly).
    rows = lax.broadcasted_iota(jnp.int32, shp, 0) + tb * tile_b
    cols = lax.broadcasted_iota(jnp.int32, shp, 1) + tf * tile_f
    idx = rows * feat_total + cols
    idx = idx ^ seed_ref[0]

    # Counter-based hash (murmur3-style finalizer) -> 32 well-mixed bits/elem.
    bits = lax.bitcast_convert_type(idx, jnp.uint32)
    bits = bits ^ (bits >> jnp.uint32(16))
    bits = bits * jnp.uint32(0x7FEB352D)
    bits = bits ^ (bits >> jnp.uint32(15))
    bits = bits * jnp.uint32(0x846CA68B)
    bits = bits ^ (bits >> jnp.uint32(16))

    # Uniform [0, 1): 23 random bits into the mantissa of [1, 2), minus 1.
    mant = (bits >> jnp.uint32(9)) | jnp.uint32(0x3F800000)
    u = lax.bitcast_convert_type(mant, jnp.float32) - jnp.float32(1.0)

    # (TILE_B, 1) per-row threshold broadcasts over lanes; scalar p is a
    # compile-time constant.
    p = p_ref[...] if p_per_row else jnp.float32(p_const)
    keep = u > p                      # drop where u <= p (torch semantics)
    x = x_ref[...]
    o_ref[...] = jnp.where(keep, x, jnp.zeros_like(x))


@functools.partial(jax.jit, static_argnames=("p", "random_p", "training"))
def random_drop_forward(x, *, p, seed, key=None, random_p=False, training=True):
    """Pallas implementation of RandomDrop.forward.

    x        : (B, ...) array; trailing dims are flattened to a feature axis.
    p        : python float in [0, 1], max drop probability (static).
    seed     : int32 scalar seed for the drop mask (traced, no recompile).
    key      : jax PRNG key, only used when random_p=True (per-sample p draw).
    """
    if not (0.0 <= float(p) <= 1.0):
        raise ValueError(
            "Random drop probability has to be between 0 and 1, but got "
            f"{p}")
    if not training:
        return x

    orig_shape = x.shape
    B = orig_shape[0]
    x2 = x.reshape(B, -1)
    F = x2.shape[1]

    # Adaptive, lane-dense tiles: ~512K elements (2 MiB at f32) per tile,
    # regardless of how skinny the batch axis is.  Block dims are either a
    # multiple of (8, 128) or the full array dim, as Mosaic requires.
    TILE_B = B if B <= 256 else 256
    target_elems = 1 << 19                                   # ~512K elems/tile
    tf_cap = max(128, (target_elems // TILE_B) // 128 * 128)
    TILE_F = F if F <= tf_cap else tf_cap
    grid = (pl.cdiv(B, TILE_B), pl.cdiv(F, TILE_F))

    seed_arr = jnp.reshape(jnp.asarray(seed, dtype=jnp.int32), (1,))

    kernel = functools.partial(
        _random_drop_kernel,
        feat_total=F, tile_b=TILE_B, tile_f=TILE_F,
        p_const=float(p), p_per_row=random_p,
    )

    x_spec = pl.BlockSpec((TILE_B, TILE_F), lambda i, j: (i, j))
    in_specs = [pl.BlockSpec(memory_space=pltpu.MemorySpace.SMEM)]   # seed
    args = [seed_arr]
    if random_p:
        assert key is not None, "random_p=True requires a PRNG key"
        # torch.rand(B, 1) * p -> per-sample threshold, streamed from VMEM.
        p_arr = jax.random.uniform(key, (B, 1), dtype=jnp.float32) * jnp.float32(p)
        in_specs.append(pl.BlockSpec((TILE_B, 1), lambda i, j: (i, 0)))
        args.append(p_arr)
    in_specs.append(x_spec)
    args.append(x2)

    out2 = pl.pallas_call(
        kernel,
        out_shape=jax.ShapeDtypeStruct(x2.shape, x.dtype),
        grid=grid,
        in_specs=in_specs,
        out_specs=x_spec,
        compiler_params=pltpu.CompilerParams(
            dimension_semantics=("parallel", "parallel")),
    )(*args)

    return out2.reshape(orig_shape)


if __name__ == "__main__":
    key = jax.random.PRNGKey(0)
    kx, kp = jax.random.split(key)

    # Small NCHW-style input: batch=2, channels=4, spatial=16x16.
    x = jax.random.normal(kx, (2, 4, 16, 16), dtype=jnp.float32)
    p = 0.3

    # random_p=False path (scalar p).
    out = random_drop_forward(x, p=p, seed=1234, training=True)
    out = jax.block_until_ready(out)

    # random_p=True path (per-sample p = rand(B,1) * p).
    out_rp = random_drop_forward(
        x, p=0.5, seed=5678, key=kp, random_p=True, training=True
    )
    out_rp = jax.block_until_ready(out_rp)

    # eval mode is identity.
    out_eval = random_drop_forward(x, p=p, seed=0, training=False)
    out_eval = jax.block_until_ready(out_eval)

    # Sanity: dropped elements are exactly 0, kept elements equal x;
    # drop rate is roughly p for the scalar path; eval mode returns x.
    for o in (out, out_rp):
        dropped = (o == 0) & (x != 0)
        kept_ok = jnp.where(dropped, True, o == x)
        assert bool(jnp.all(kept_ok))
        frac = float(jnp.mean(dropped.astype(jnp.float32)))
        assert 0.0 <= frac <= 0.75
    frac_scalar = float(jnp.mean(((out == 0) & (x != 0)).astype(jnp.float32)))
    assert 0.1 < frac_scalar < 0.5  # ~p = 0.3 over 2048 elements
    assert bool(jnp.all(out_eval == x))

    print("KERNEL_OK")
</pallas_src>

<mosaic_0001>
module attributes {stable_mosaic.version = 11 : i64} {
  func.func @_random_drop_kernel(%arg0: i32, %arg1: i32, %arg2: memref<1xi32, #tpu.memory_space<smem>>, %arg3: memref<2x1024xf32, #tpu.memory_space<vmem>>, %arg4: memref<2x1024xf32, #tpu.memory_space<vmem>>) attributes {dimension_semantics = [#tpu.dimension_semantics<parallel>, #tpu.dimension_semantics<parallel>], iteration_bounds = array<i64: 1, 1>, scalar_prefetch = 0 : i64, scratch_operands = 0 : i64, tpu.core_type = #tpu.core_type<tc>, window_params = [{transform_indices = @transform_0, window_bounds = array<i64: 1>}, {transform_indices = @transform_1, window_bounds = array<i64: 2, 1024>}, {transform_indices = @transform_2, window_bounds = array<i64: 2, 1024>}]} {
    %0 = tpu.iota {dimensions = array<i32: 0>} : vector<2x1024xi32>
    %c2_i32 = arith.constant 2 : i32
    %1 = arith.muli %arg0, %c2_i32 : i32
    %2 = vector.broadcast %1 : i32 to vector<2x1024xi32>
    %3 = arith.addi %0, %2 : vector<2x1024xi32>
    %4 = tpu.iota {dimensions = array<i32: 1>} : vector<2x1024xi32>
    %c1024_i32 = arith.constant 1024 : i32
    %5 = arith.muli %arg1, %c1024_i32 : i32
    %6 = vector.broadcast %5 : i32 to vector<2x1024xi32>
    %7 = arith.addi %4, %6 : vector<2x1024xi32>
    %c1024_i32_0 = arith.constant 1024 : i32
    %8 = vector.broadcast %c1024_i32_0 : i32 to vector<2x1024xi32>
    %9 = arith.muli %3, %8 : vector<2x1024xi32>
    %10 = arith.addi %9, %7 : vector<2x1024xi32>
    %c0 = arith.constant 0 : index
    %11 = memref.load %arg2[%c0] : memref<1xi32, #tpu.memory_space<smem>>
    %12 = vector.broadcast %11 : i32 to vector<2x1024xi32>
    %13 = arith.xori %10, %12 : vector<2x1024xi32>
    %14 = tpu.bitcast %13 : vector<2x1024xi32> -> vector<2x1024xi32>
    %c16_i32 = arith.constant 16 : i32
    %15 = vector.broadcast %c16_i32 : i32 to vector<2x1024xi32>
    %16 = arith.shrui %14, %15 : vector<2x1024xi32>
    %17 = arith.xori %14, %16 : vector<2x1024xi32>
    %c2146121005_i32 = arith.constant 2146121005 : i32
    %18 = vector.broadcast %c2146121005_i32 : i32 to vector<2x1024xi32>
    %19 = arith.muli %17, %18 : vector<2x1024xi32>
    %c15_i32 = arith.constant 15 : i32
    %20 = vector.broadcast %c15_i32 : i32 to vector<2x1024xi32>
    %21 = arith.shrui %19, %20 : vector<2x1024xi32>
    %22 = arith.xori %19, %21 : vector<2x1024xi32>
    %c-2073254261_i32 = arith.constant -2073254261 : i32
    %23 = vector.broadcast %c-2073254261_i32 : i32 to vector<2x1024xi32>
    %24 = arith.muli %22, %23 : vector<2x1024xi32>
    %c16_i32_1 = arith.constant 16 : i32
    %25 = vector.broadcast %c16_i32_1 : i32 to vector<2x1024xi32>
    %26 = arith.shrui %24, %25 : vector<2x1024xi32>
    %27 = arith.xori %24, %26 : vector<2x1024xi32>
    %c9_i32 = arith.constant 9 : i32
    %28 = vector.broadcast %c9_i32 : i32 to vector<2x1024xi32>
    %29 = arith.shrui %27, %28 : vector<2x1024xi32>
    %c1065353216_i32 = arith.constant 1065353216 : i32
    %30 = vector.broadcast %c1065353216_i32 : i32 to vector<2x1024xi32>
    %31 = arith.ori %29, %30 : vector<2x1024xi32>
    %32 = tpu.bitcast %31 : vector<2x1024xi32> -> vector<2x1024xf32>
    %cst = arith.constant 1.000000e+00 : f32
    %33 = vector.broadcast %cst : f32 to vector<2x1024xf32>
    %34 = arith.subf %32, %33 : vector<2x1024xf32>
    %cst_2 = arith.constant 3.000000e-01 : f32
    %35 = vector.broadcast %cst_2 : f32 to vector<2x1024xf32>
    %36 = arith.cmpf ogt, %34, %35 : vector<2x1024xf32>
    %c0_3 = arith.constant 0 : index
    %c0_4 = arith.constant 0 : index
    %37 = vector.load %arg3[%c0_3, %c0_4] : memref<2x1024xf32, #tpu.memory_space<vmem>>, vector<2x1024xf32>
    %cst_5 = arith.constant 0.000000e+00 : f32
    %38 = vector.broadcast %cst_5 : f32 to vector<2x1024xf32>
    %39 = arith.select %36, %37, %38 : vector<2x1024xi1>, vector<2x1024xf32>
    %c0_6 = arith.constant 0 : index
    %c0_7 = arith.constant 0 : index
    %40 = vector.load %arg4[%c0_6, %c0_7] : memref<2x1024xf32, #tpu.memory_space<vmem>>, vector<2x1024xf32>
    tpu.vector_store %arg4[%c0_6, %c0_7], %39 {strides = array<i32>} : memref<2x1024xf32, #tpu.memory_space<vmem>>, vector<2x1024xf32>,
    return
  }
  func.func @transform_0(%arg0: i32, %arg1: i32) -> i32 {
    %c0_i32 = arith.constant 0 : i32
    %c0_i32_0 = arith.constant 0 : i32
    return %c0_i32 : i32
  }
  func.func @transform_1(%arg0: i32, %arg1: i32) -> (i32, i32) {
    %c0_i32 = arith.constant 0 : i32
    return %arg0, %arg1 : i32, i32
  }
  func.func @transform_2(%arg0: i32, %arg1: i32) -> (i32, i32) {
    %c0_i32 = arith.constant 0 : i32
    return %arg0, %arg1 : i32, i32
  }
}

</mosaic_0001>

<llo_original>
// kernel: random_drop_forward.1
$region0: #{random_drop_forward.1}
  #allocation0 [shape = 'u32[]', space=smem, size = 0x4, offset = 0x4, fixed_abs, tag = 'smem constant byte address 0x4 - core index']
  #allocation1 [shape = 'u32[144,128]{1,0:T(1,128)}', space=vmem, size = 0x12000, scoped, tag = 'internal scratch']
  #allocation2 [shape = 's32[1]{0:T(128)S(6)}', space=smem, size = 0x200, scoped, tag = 'scoped memory for random_drop_forward.1']
  %s0 = inlined_call_operand.<no memory space> [shape: s32[1], index: 0, kind: input, shape index: {}]
  %s1 = inlined_call_operand.vmem [shape: f32[2,1024], index: 1, kind: input, shape index: {}]
  %s2 = inlined_call_operand.vmem [shape: f32[2,1024], index: 2, kind: output, shape index: {}]
  %s3 = sld [smem:[#allocation0]]
  $region18: #{random_drop_forward.1} parent=0
    _
  %s5 = ssub.s32 1, %s3
  %s6 = scalar_select 0, %s5, %s3
  %7 = sst [smem:[#allocation2]] %s0
  // Predicated region
  $region2: #{random_drop_forward.1} parent=0 // pred_check
    _
  $region3: #{random_drop_forward.1} parent=0 // pred_check_branch
    %9 = sbr.rel (0) target = $region5
  $region4: #{random_drop_forward.1} parent=0 // pred_region
    _
  $region5: #{random_drop_forward.1} parent=0 // pred_fallthru
    _
  // Predicated region
  $region6: #{random_drop_forward.1} parent=0 // pred_check
    _
  $region7: #{random_drop_forward.1} parent=0 // pred_check_branch
    %11 = sbr.rel (0) target = $region9
  $region8: #{random_drop_forward.1} parent=0 // pred_region
    _
  $region9: #{random_drop_forward.1} parent=0 // pred_fallthru
    _
  %v12 = vlaneseq
  %v13 = vshrl.u32 %v12, 7
  %s14 = smul.u32 0, 2
  %v15 = vstv %s14
  %v16 = vadd.s32 %v13, %v15
  %v17 = vlaneseq
  %v18 = vand.u32 %v17, 127
  %v19 = vadd.s32 %v18, 128
  %v20 = vadd.s32 %v18, 256
  %v21 = vadd.s32 %v18, 384
  %v22 = vadd.s32 %v18, 512
  %v23 = vadd.s32 %v18, 640
  %v24 = vadd.s32 %v18, 768
  %v25 = vadd.s32 %v18, 896
  %s26 = smul.u32 0, 1024
  %v27 = vstv %s26
  %v28 = vadd.s32 %v18, %v27
  %v29 = vadd.s32 %v19, %v27
  %v30 = vadd.s32 %v20, %v27
  %v31 = vadd.s32 %v21, %v27
  %v32 = vadd.s32 %v22, %v27
  %v33 = vadd.s32 %v23, %v27
  %v34 = vadd.s32 %v24, %v27
  %v35 = vadd.s32 %v25, %v27
  %v36 = vmul.u32 %v16, 1024
  %v37 = vadd.s32 %v36, %v28
  %v38 = vadd.s32 %v36, %v29
  %v39 = vadd.s32 %v36, %v30
  %v40 = vadd.s32 %v36, %v31
  %v41 = vadd.s32 %v36, %v32
  %v42 = vadd.s32 %v36, %v33
  %v43 = vadd.s32 %v36, %v34
  %v44 = vadd.s32 %v36, %v35
  %s45 = sld [smem:[#allocation2]]
  %v46 = vstv %s45
  %v47 = vxor.u32 %v37, %v46
  %v48 = vxor.u32 %v38, %v46
  %v49 = vxor.u32 %v39, %v46
  %v50 = vxor.u32 %v40, %v46
  %v51 = vxor.u32 %v41, %v46
  %v52 = vxor.u32 %v42, %v46
  %v53 = vxor.u32 %v43, %v46
  %v54 = vxor.u32 %v44, %v46
  %v55 = vshrl.u32 %v47, 16
  %v56 = vshrl.u32 %v48, 16
  %v57 = vshrl.u32 %v49, 16
  %v58 = vshrl.u32 %v50, 16
  %v59 = vshrl.u32 %v51, 16
  %v60 = vshrl.u32 %v52, 16
  %v61 = vshrl.u32 %v53, 16
  %v62 = vshrl.u32 %v54, 16
  %v63 = vxor.u32 %v47, %v55
  %v64 = vxor.u32 %v48, %v56
  %v65 = vxor.u32 %v49, %v57
  %v66 = vxor.u32 %v50, %v58
  %v67 = vxor.u32 %v51, %v59
  %v68 = vxor.u32 %v52, %v60
  %v69 = vxor.u32 %v53, %v61
  %v70 = vxor.u32 %v54, %v62
  %v71 = vmul.u32 %v63, 2146121005
  %v72 = vmul.u32 %v64, 2146121005
  %v73 = vmul.u32 %v65, 2146121005
  %v74 = vmul.u32 %v66, 2146121005
  %v75 = vmul.u32 %v67, 2146121005
  %v76 = vmul.u32 %v68, 2146121005
  %v77 = vmul.u32 %v69, 2146121005
  %v78 = vmul.u32 %v70, 2146121005
  %v79 = vshrl.u32 %v71, 15
  %v80 = vshrl.u32 %v72, 15
  %v81 = vshrl.u32 %v73, 15
  %v82 = vshrl.u32 %v74, 15
  %v83 = vshrl.u32 %v75, 15
  %v84 = vshrl.u32 %v76, 15
  %v85 = vshrl.u32 %v77, 15
  %v86 = vshrl.u32 %v78, 15
  %v87 = vxor.u32 %v71, %v79
  %v88 = vxor.u32 %v72, %v80
  %v89 = vxor.u32 %v73, %v81
  %v90 = vxor.u32 %v74, %v82
  %v91 = vxor.u32 %v75, %v83
  %v92 = vxor.u32 %v76, %v84
  %v93 = vxor.u32 %v77, %v85
  %v94 = vxor.u32 %v78, %v86
  %v95 = vmul.u32 %v87, 2221713035
  %v96 = vmul.u32 %v88, 2221713035
  %v97 = vmul.u32 %v89, 2221713035
  %v98 = vmul.u32 %v90, 2221713035
  %v99 = vmul.u32 %v91, 2221713035
  %v100 = vmul.u32 %v92, 2221713035
  %v101 = vmul.u32 %v93, 2221713035
  %v102 = vmul.u32 %v94, 2221713035
  %v103 = vshrl.u32 %v95, 16
  %v104 = vshrl.u32 %v96, 16
  %v105 = vshrl.u32 %v97, 16
  %v106 = vshrl.u32 %v98, 16
  %v107 = vshrl.u32 %v99, 16
  %v108 = vshrl.u32 %v100, 16
  %v109 = vshrl.u32 %v101, 16
  %v110 = vshrl.u32 %v102, 16
  %v111 = vxor.u32 %v95, %v103
  %v112 = vxor.u32 %v96, %v104
  %v113 = vxor.u32 %v97, %v105
  %v114 = vxor.u32 %v98, %v106
  %v115 = vxor.u32 %v99, %v107
  %v116 = vxor.u32 %v100, %v108
  %v117 = vxor.u32 %v101, %v109
  %v118 = vxor.u32 %v102, %v110
  %v119 = vshrl.u32 %v111, 9
  %v120 = vshrl.u32 %v112, 9
  %v121 = vshrl.u32 %v113, 9
  %v122 = vshrl.u32 %v114, 9
  %v123 = vshrl.u32 %v115, 9
  %v124 = vshrl.u32 %v116, 9
  %v125 = vshrl.u32 %v117, 9
  %v126 = vshrl.u32 %v118, 9
  %v127 = vor.u32 %v119, 1065353216
  %v128 = vor.u32 %v120, 1065353216
  %v129 = vor.u32 %v121, 1065353216
  %v130 = vor.u32 %v122, 1065353216
  %v131 = vor.u32 %v123, 1065353216
  %v132 = vor.u32 %v124, 1065353216
  %v133 = vor.u32 %v125, 1065353216
  %v134 = vor.u32 %v126, 1065353216
  %v143 = vsub.f32 %v127, 1.0
  %v144 = vsub.f32 %v128, 1.0
  %v145 = vsub.f32 %v129, 1.0
  %v146 = vsub.f32 %v130, 1.0
  %v147 = vsub.f32 %v131, 1.0
  %v148 = vsub.f32 %v132, 1.0
  %v149 = vsub.f32 %v133, 1.0
  %v150 = vsub.f32 %v134, 1.0
  %vm151 = vcmp.gt.f32.partialorder %v143, 0.3
  %vm152 = vcmp.gt.f32.partialorder %v144, 0.3
  %vm153 = vcmp.gt.f32.partialorder %v145, 0.3
  %vm154 = vcmp.gt.f32.partialorder %v146, 0.3
  %vm155 = vcmp.gt.f32.partialorder %v147, 0.3
  %vm156 = vcmp.gt.f32.partialorder %v148, 0.3
  %vm157 = vcmp.gt.f32.partialorder %v149, 0.3
  %vm158 = vcmp.gt.f32.partialorder %v150, 0.3
  %v159 = vld [vmem:[%s1] sm:$0xff]
  %v160 = vld [vmem:[%s1 + $0x8] sm:$0xff]
  %v163 = vcombine.high %v159, %v159
  %v165 = vunpack.c.l.s4 1983009808
  %v166 = vunpack.c.0.s8 %v165
  %v167 = vlaneseq
  %v168 = vshrl.u32 %v167, 7
  %v169 = vsub.s32 %v166, %v168
  %v170 = vrot.slane %v159, %v169
  %v172 = vunpack.c.l.s4 1983009808
  %v173 = vunpack.c.0.s8 %v172
  %v174 = vlaneseq
  %v175 = vshrl.u32 %v174, 7
  %v176 = vsub.s32 %v173, %v175
  %v177 = vrot.slane %v163, %v176
  %v178 = vcombine.high %v170, %v170
  %v179 = vcombine.high %v177, %v177
  %v180 = vcombine.high %v160, %v160
  %v182 = vunpack.c.l.s4 1983009808
  %v183 = vunpack.c.0.s8 %v182
  %v184 = vlaneseq
  %v185 = vshrl.u32 %v184, 7
  %v186 = vsub.s32 %v183, %v185
  %v187 = vrot.slane %v160, %v186
  %v189 = vunpack.c.l.s4 1983009808
  %v190 = vunpack.c.0.s8 %v189
  %v191 = vlaneseq
  %v192 = vshrl.u32 %v191, 7
  %v193 = vsub.s32 %v190, %v192
  %v194 = vrot.slane %v180, %v193
  %v195 = vcombine.high %v187, %v187
  %v196 = vcombine.high %v194, %v194
  %v205 = vsel %vm151, %v170, 0.0
  %v206 = vsel %vm152, %v178, 0.0
  %v207 = vsel %vm153, %v177, 0.0
  %v208 = vsel %vm154, %v179, 0.0
  %v209 = vsel %vm155, %v187, 0.0
  %v210 = vsel %vm156, %v195, 0.0
  %v211 = vsel %vm157, %v194, 0.0
  %v212 = vsel %vm158, %v196, 0.0
  %v221 = vcombine.low %v205, %v206
  %v222 = vcombine.low %v207, %v208
  %v224 = vunpack.c.l.s4 1983009808
  %v225 = vunpack.c.0.s8 %v224
  %v226 = vlaneseq
  %v227 = vshrl.u32 %v226, 7
  %v228 = vsub.s32 %v225, %v227
  %v229 = vrot.slane %v221, %v228
  %v231 = vunpack.c.l.s4 1983009808
  %v232 = vunpack.c.0.s8 %v231
  %v233 = vlaneseq
  %v234 = vshrl.u32 %v233, 7
  %v235 = vsub.s32 %v232, %v234
  %v236 = vrot.slane %v222, %v235
  %v237 = vcombine.low %v229, %v236
  %v238 = vcombine.low %v209, %v210
  %v239 = vcombine.low %v211, %v212
  %v241 = vunpack.c.l.s4 1983009808
  %v242 = vunpack.c.0.s8 %v241
  %v243 = vlaneseq
  %v244 = vshrl.u32 %v243, 7
  %v245 = vsub.s32 %v242, %v244
  %v246 = vrot.slane %v238, %v245
  %v248 = vunpack.c.l.s4 1983009808
  %v249 = vunpack.c.0.s8 %v248
  %v250 = vlaneseq
  %v251 = vshrl.u32 %v250, 7
  %v252 = vsub.s32 %v249, %v251
  %v253 = vrot.slane %v239, %v252
  %v254 = vcombine.low %v246, %v253
  %257 = vst [vmem:[%s2] sm:$0xff] %v237
  %258 = vst [vmem:[%s2 + $0x8] sm:$0xff] %v254
  // Predicated region
  $region10: #{random_drop_forward.1} parent=0 // pred_check
    _
  $region11: #{random_drop_forward.1} parent=0 // pred_check_branch
    %260 = sbr.rel (0) target = $region13
  $region12: #{random_drop_forward.1} parent=0 // pred_region
    _
  $region13: #{random_drop_forward.1} parent=0 // pred_fallthru
    _
  // Predicated region
  $region14: #{random_drop_forward.1} parent=0 // pred_check
    _
  $region15: #{random_drop_forward.1} parent=0 // pred_check_branch
    %262 = sbr.rel (0) target = $region17
  $region16: #{random_drop_forward.1} parent=0 // pred_region
    _
  $region17: #{random_drop_forward.1} parent=0 // pred_fallthru
    _

</llo_original>
